<compile_context>
chip_gen: v7x
topology: tpu7x:2x2x1
jax: 0.10.0
libtpu: 0.0.40
codegen_flags: <defaults>
</compile_context>

<pallas_src>
import jax
import jax.numpy as jnp
from jax.experimental import pallas as pl
from jax.experimental.pallas import tpu as pltpu

LANE = 128      # TPU lane width / MXU-friendly feature width
SUBLANE = 8     # sublane granularity for the batch (second-to-last) dim
TB_MAX = 1024   # max batch tile (VMEM is nowhere near limiting at these sizes)


def _round_up(n, m):
    return ((n + m - 1) // m) * m


def _choose_batch_tiling(B):
    """Pick (TB, Bp): TB <= TB_MAX, multiple of 8, grid steps even and >= 2 (v7x 2-TC)."""
    n_steps = max(2, -(-B // TB_MAX))
    if n_steps % 2:
        n_steps += 1
    tb = _round_up(-(-B // n_steps), SUBLANE)
    return tb, tb * n_steps


def _ratio_kernel(x_ref, t0_ref, t1_ref,
                  w0_ref, b0_ref, w1_ref, b1_ref, w2_ref, b2_ref,
                  w3_ref, b3_ref,
                  out_ref, xin_ref):
    """One batch tile: pack inputs -> 3x(bf16 matmul + tanh) -> VPU final layer -> exp."""
    xs = x_ref.shape[1]
    ts = t0_ref.shape[1]

    # Pack the three input groups into adjacent lanes of an f32 scratch so layer 1
    # is a single K=32 MXU dot.  The masked lane-offset stores are cheap store/VPU
    # filler compared with the 2 extra dots they replace.
    xin_ref[:, 0:xs] = x_ref[...]
    xin_ref[:, xs:xs + ts] = t0_ref[...]
    xin_ref[:, xs + ts:xs + 2 * ts] = t1_ref[...]
    x0 = xin_ref[...].astype(jnp.bfloat16)

    # Three hidden layers on the MXU with bf16 operands, f32 accumulation.
    h1 = jnp.tanh(jnp.dot(x0, w0_ref[...],
                          preferred_element_type=jnp.float32) + b0_ref[...])
    h2 = jnp.tanh(jnp.dot(h1.astype(jnp.bfloat16), w1_ref[...],
                          preferred_element_type=jnp.float32) + b1_ref[...])
    h3 = jnp.tanh(jnp.dot(h2.astype(jnp.bfloat16), w2_ref[...],
                          preferred_element_type=jnp.float32) + b2_ref[...])

    # Final Linear(H, 1): VPU broadcast-multiply + XLU lane reduction -> (TB, 1).
    # Padded hidden lanes of w3 are zero, so the reduction is exact.
    y4 = jnp.sum(h3 * w3_ref[...], axis=-1, keepdims=True) + b3_ref[...]
    out_ref[...] = jnp.exp(y4)   # (TB, 1): 4 B/row written (masked vst, tiny footprint)


def init_params(key, x_size, theta_size, hidden_size):
    """Deterministic init mimicking torch.nn.Linear's U(-1/sqrt(fan_in), +1/sqrt(fan_in)).

    Weights stored pre-transposed as (in_features, out_features) == PyTorch weight.T.
    """
    din = x_size + 2 * theta_size
    dims = [(din, hidden_size), (hidden_size, hidden_size),
            (hidden_size, hidden_size), (hidden_size, 1)]
    params = []
    for fan_in, fan_out in dims:
        key, kw, kb = jax.random.split(key, 3)
        bound = 1.0 / jnp.sqrt(fan_in)
        w = jax.random.uniform(kw, (fan_in, fan_out), jnp.float32, -bound, bound)
        b = jax.random.uniform(kb, (1, fan_out), jnp.float32, -bound, bound)
        params += [w, b]
    return tuple(params)


def prepare_params(params):
    """One-time layout prep: zero-pad hidden dim to LANE, weights -> bf16, w3 -> f32 row.

    Zero-padding is exact: padded hidden lanes see tanh(0 + 0) = 0, padded weight
    rows/cols of later layers are zero, and the padded lanes of the final w3 row are
    zero, so padding never touches the real output (and zeros stay exact in bf16).
    """
    w0, b0, w1, b1, w2, b2, w3, b3 = params
    H = w0.shape[1]
    Hp = _round_up(H, LANE)
    dH = Hp - H

    w0p = jnp.pad(w0, ((0, 0), (0, dH))).astype(jnp.bfloat16)   # (Din, Hp) bf16
    b0p = jnp.pad(b0, ((0, 0), (0, dH)))                        # (1, Hp)   f32
    w1p = jnp.pad(w1, ((0, dH), (0, dH))).astype(jnp.bfloat16)  # (Hp, Hp)  bf16
    b1p = jnp.pad(b1, ((0, 0), (0, dH)))
    w2p = jnp.pad(w2, ((0, dH), (0, dH))).astype(jnp.bfloat16)
    b2p = jnp.pad(b2, ((0, 0), (0, dH)))
    w3p = jnp.pad(w3, ((0, dH), (0, 0))).T                      # (1, Hp) f32 row (VPU path)
    b3p = b3                                                    # (1, 1)  f32
    return (w0p, b0p, w1p, b1p, w2p, b2p, w3p, b3p)


@jax.jit
def ratio_forward(x, theta0, theta1, padded_params):
    """Batch-tiled pallas_call; only batch padding / final column squeeze stay outside."""
    w0p, b0p, w1p, b1p, w2p, b2p, w3p, b3p = padded_params
    B, x_size = x.shape
    t_size = theta0.shape[1]
    d_in = x_size + 2 * t_size
    Hp = w1p.shape[0]

    TB, Bp = _choose_batch_tiling(B)
    if Bp != B:
        pad = ((0, Bp - B), (0, 0))
        x = jnp.pad(x, pad)
        theta0 = jnp.pad(theta0, pad)
        theta1 = jnp.pad(theta1, pad)

    row_spec = lambda n: pl.BlockSpec((TB, n), lambda i: (i, 0))
    const_spec = lambda shape: pl.BlockSpec(shape, lambda i: (0, 0))  # VMEM-resident

    out = pl.pallas_call(
        _ratio_kernel,
        out_shape=jax.ShapeDtypeStruct((Bp, 1), jnp.float32),
        grid=(Bp // TB,),
        in_specs=[
            row_spec(x_size), row_spec(t_size), row_spec(t_size),
            const_spec((d_in, Hp)), const_spec((1, Hp)),
            const_spec((Hp, Hp)), const_spec((1, Hp)),
            const_spec((Hp, Hp)), const_spec((1, Hp)),
            const_spec((1, Hp)), const_spec((1, 1)),
        ],
        out_specs=pl.BlockSpec((TB, 1), lambda i: (i, 0)),
        scratch_shapes=[pltpu.VMEM((TB, d_in), jnp.float32)],
        compiler_params=pltpu.CompilerParams(
            dimension_semantics=("parallel",),   # v7x: shard batch tiles over 2 TCs
        ),
    )(x, theta0, theta1, w0p, b0p, w1p, b1p, w2p, b2p, w3p, b3p)

    return out[:B, 0]                                        # squeeze(1) + drop padding


def ratio_reference(x, theta0, theta1, params):
    """Pure-JAX f32 reference of the PyTorch forward for a correctness check."""
    w0, b0, w1, b1, w2, b2, w3, b3 = params
    x0 = jnp.concatenate((x, theta0, theta1), axis=1)
    h = jnp.tanh(x0 @ w0 + b0)
    h = jnp.tanh(h @ w1 + b1)
    h = jnp.tanh(h @ w2 + b2)
    y = h @ w3 + b3
    return jnp.exp(y)[:, 0]


if __name__ == "__main__":
    x_size, theta_size, hidden_size = 16, 8, 32
    batch = 8

    key = jax.random.PRNGKey(0)
    kp, kx, k0, k1 = jax.random.split(key, 4)
    raw_params = init_params(kp, x_size, theta_size, hidden_size)
    padded_params = prepare_params(raw_params)

    x = jax.random.normal(kx, (batch, x_size), jnp.float32)
    theta0 = jax.random.normal(k0, (batch, theta_size), jnp.float32)
    theta1 = jax.random.normal(k1, (batch, theta_size), jnp.float32)

    out = jax.block_until_ready(ratio_forward(x, theta0, theta1, padded_params))
    ref = ratio_reference(x, theta0, theta1, raw_params)

    assert out.shape == (batch,)
    # bf16 weights/activations in the kernel (f32 accumulation) vs. pure-f32 reference:
    # exp() amplifies relative error, so compare with a bf16-appropriate tolerance.
    assert jnp.allclose(out, ref, rtol=5e-2, atol=1e-5), (out, ref)
    print("KERNEL_OK")
</pallas_src>

<mosaic_0001>
module attributes {stable_mosaic.version = 11 : i64} {
  func.func @_ratio_kernel(%arg0: i32, %arg1: memref<8x16xf32, #tpu.memory_space<vmem>>, %arg2: memref<8x8xf32, #tpu.memory_space<vmem>>, %arg3: memref<8x8xf32, #tpu.memory_space<vmem>>, %arg4: memref<32x128xbf16, #tpu.memory_space<vmem>>, %arg5: memref<1x128xf32, #tpu.memory_space<vmem>>, %arg6: memref<128x128xbf16, #tpu.memory_space<vmem>>, %arg7: memref<1x128xf32, #tpu.memory_space<vmem>>, %arg8: memref<128x128xbf16, #tpu.memory_space<vmem>>, %arg9: memref<1x128xf32, #tpu.memory_space<vmem>>, %arg10: memref<1x128xf32, #tpu.memory_space<vmem>>, %arg11: memref<1x1xf32, #tpu.memory_space<vmem>>, %arg12: memref<8x1xf32, #tpu.memory_space<vmem>>, %arg13: memref<8x32xf32, #tpu.memory_space<vmem>>) attributes {dimension_semantics = [#tpu.dimension_semantics<parallel>], iteration_bounds = array<i64: 2>, scalar_prefetch = 0 : i64, scratch_operands = 1 : i64, tpu.core_type = #tpu.core_type<tc>, window_params = [{transform_indices = @transform_0, window_bounds = array<i64: 8, 16>}, {transform_indices = @transform_1, window_bounds = array<i64: 8, 8>}, {transform_indices = @transform_2, window_bounds = array<i64: 8, 8>}, {pipeline_mode = #tpu.pipeline_mode<synchronous>, transform_indices = @transform_3, window_bounds = array<i64: 32, 128>}, {pipeline_mode = #tpu.pipeline_mode<synchronous>, transform_indices = @transform_4, window_bounds = array<i64: 1, 128>}, {pipeline_mode = #tpu.pipeline_mode<synchronous>, transform_indices = @transform_5, window_bounds = array<i64: 128, 128>}, {pipeline_mode = #tpu.pipeline_mode<synchronous>, transform_indices = @transform_6, window_bounds = array<i64: 1, 128>}, {pipeline_mode = #tpu.pipeline_mode<synchronous>, transform_indices = @transform_7, window_bounds = array<i64: 128, 128>}, {pipeline_mode = #tpu.pipeline_mode<synchronous>, transform_indices = @transform_8, window_bounds = array<i64: 1, 128>}, {pipeline_mode = #tpu.pipeline_mode<synchronous>, transform_indices = @transform_9, window_bounds = array<i64: 1, 128>}, {pipeline_mode = #tpu.pipeline_mode<synchronous>, transform_indices = @transform_10, window_bounds = array<i64: 1, 1>}, {transform_indices = @transform_11, window_bounds = array<i64: 8, 1>}]} {
    %c0 = arith.constant 0 : index
    %c0_0 = arith.constant 0 : index
    %0 = vector.load %arg1[%c0, %c0_0] : memref<8x16xf32, #tpu.memory_space<vmem>>, vector<8x16xf32>
    %c0_1 = arith.constant 0 : index
    %c0_2 = arith.constant 0 : index
    %1 = vector.load %arg13[%c0_1, %c0_2] : memref<8x32xf32, #tpu.memory_space<vmem>>, vector<8x16xf32>
    tpu.vector_store %arg13[%c0_1, %c0_2], %0 {strides = array<i32>} : memref<8x32xf32, #tpu.memory_space<vmem>>, vector<8x16xf32>,
    %c0_3 = arith.constant 0 : index
    %c0_4 = arith.constant 0 : index
    %2 = vector.load %arg2[%c0_3, %c0_4] : memref<8x8xf32, #tpu.memory_space<vmem>>, vector<8x8xf32>
    %c0_5 = arith.constant 0 : index
    %c16 = arith.constant 16 : index
    %3 = vector.load %arg13[%c0_5, %c16] : memref<8x32xf32, #tpu.memory_space<vmem>>, vector<8x8xf32>
    tpu.vector_store %arg13[%c0_5, %c16], %2 {strides = array<i32>} : memref<8x32xf32, #tpu.memory_space<vmem>>, vector<8x8xf32>,
    %c0_6 = arith.constant 0 : index
    %c0_7 = arith.constant 0 : index
    %4 = vector.load %arg3[%c0_6, %c0_7] : memref<8x8xf32, #tpu.memory_space<vmem>>, vector<8x8xf32>
    %c0_8 = arith.constant 0 : index
    %c24 = arith.constant 24 : index
    %5 = vector.load %arg13[%c0_8, %c24] : memref<8x32xf32, #tpu.memory_space<vmem>>, vector<8x8xf32>
    tpu.vector_store %arg13[%c0_8, %c24], %4 {strides = array<i32>} : memref<8x32xf32, #tpu.memory_space<vmem>>, vector<8x8xf32>,
    %c0_9 = arith.constant 0 : index
    %c0_10 = arith.constant 0 : index
    %6 = vector.load %arg13[%c0_9, %c0_10] : memref<8x32xf32, #tpu.memory_space<vmem>>, vector<8x32xf32>
    %7 = arith.truncf %6 : vector<8x32xf32> to vector<8x32xbf16>
    %c0_11 = arith.constant 0 : index
    %c0_12 = arith.constant 0 : index
    %8 = vector.load %arg4[%c0_11, %c0_12] : memref<32x128xbf16, #tpu.memory_space<vmem>>, vector<32x128xbf16>
    %cst = arith.constant dense<0.000000e+00> : vector<8x128xf32>
    %9 = tpu.matmul %7, %8, %cst {dimension_numbers = #tpu.dot_dimension_numbers<[1], [0], [0], [1], [0, 0, 1, 1], [], []>} : vector<8x32xbf16>, vector<32x128xbf16>, vector<8x128xf32> -> vector<8x128xf32>
    %c0_13 = arith.constant 0 : index
    %c0_14 = arith.constant 0 : index
    %10 = vector.load %arg5[%c0_13, %c0_14] : memref<1x128xf32, #tpu.memory_space<vmem>>, vector<1x128xf32>
    %11 = vector.broadcast %10 : vector<1x128xf32> to vector<8x128xf32>
    %12 = arith.addf %9, %11 : vector<8x128xf32>
    %13 = math.tanh %12 : vector<8x128xf32>
    %14 = arith.truncf %13 : vector<8x128xf32> to vector<8x128xbf16>
    %c0_15 = arith.constant 0 : index
    %c0_16 = arith.constant 0 : index
    %15 = vector.load %arg6[%c0_15, %c0_16] : memref<128x128xbf16, #tpu.memory_space<vmem>>, vector<128x128xbf16>
    %cst_17 = arith.constant dense<0.000000e+00> : vector<8x128xf32>
    %16 = tpu.matmul %14, %15, %cst_17 {dimension_numbers = #tpu.dot_dimension_numbers<[1], [0], [0], [1], [0, 0, 1, 1], [], []>} : vector<8x128xbf16>, vector<128x128xbf16>, vector<8x128xf32> -> vector<8x128xf32>
    %c0_18 = arith.constant 0 : index
    %c0_19 = arith.constant 0 : index
    %17 = vector.load %arg7[%c0_18, %c0_19] : memref<1x128xf32, #tpu.memory_space<vmem>>, vector<1x128xf32>
    %18 = vector.broadcast %17 : vector<1x128xf32> to vector<8x128xf32>
    %19 = arith.addf %16, %18 : vector<8x128xf32>
    %20 = math.tanh %19 : vector<8x128xf32>
    %21 = arith.truncf %20 : vector<8x128xf32> to vector<8x128xbf16>
    %c0_20 = arith.constant 0 : index
    %c0_21 = arith.constant 0 : index
    %22 = vector.load %arg8[%c0_20, %c0_21] : memref<128x128xbf16, #tpu.memory_space<vmem>>, vector<128x128xbf16>
    %cst_22 = arith.constant dense<0.000000e+00> : vector<8x128xf32>
    %23 = tpu.matmul %21, %22, %cst_22 {dimension_numbers = #tpu.dot_dimension_numbers<[1], [0], [0], [1], [0, 0, 1, 1], [], []>} : vector<8x128xbf16>, vector<128x128xbf16>, vector<8x128xf32> -> vector<8x128xf32>
    %c0_23 = arith.constant 0 : index
    %c0_24 = arith.constant 0 : index
    %24 = vector.load %arg9[%c0_23, %c0_24] : memref<1x128xf32, #tpu.memory_space<vmem>>, vector<1x128xf32>
    %25 = vector.broadcast %24 : vector<1x128xf32> to vector<8x128xf32>
    %26 = arith.addf %23, %25 : vector<8x128xf32>
    %27 = math.tanh %26 : vector<8x128xf32>
    %c0_25 = arith.constant 0 : index
    %c0_26 = arith.constant 0 : index
    %28 = vector.load %arg10[%c0_25, %c0_26] : memref<1x128xf32, #tpu.memory_space<vmem>>, vector<1x128xf32>
    %29 = vector.broadcast %28 : vector<1x128xf32> to vector<8x128xf32>
    %30 = arith.mulf %27, %29 : vector<8x128xf32>
    %cst_27 = arith.constant dense<0.000000e+00> : vector<8xf32>
    %31 = vector.multi_reduction <add>, %30, %cst_27 [1] : vector<8x128xf32> to vector<8xf32>
    %32 = vector.shape_cast %31 : vector<8xf32> to vector<8x1xf32>
    %c0_28 = arith.constant 0 : index
    %c0_29 = arith.constant 0 : index
    %33 = vector.load %arg11[%c0_28, %c0_29] : memref<1x1xf32, #tpu.memory_space<vmem>>, vector<1x1xf32>
    %34 = vector.broadcast %33 : vector<1x1xf32> to vector<8x1xf32>
    %35 = arith.addf %32, %34 : vector<8x1xf32>
    %36 = math.exp %35 : vector<8x1xf32>
    %c0_30 = arith.constant 0 : index
    %c0_31 = arith.constant 0 : index
    %37 = vector.load %arg12[%c0_30, %c0_31] : memref<8x1xf32, #tpu.memory_space<vmem>>, vector<8x1xf32>
    tpu.vector_store %arg12[%c0_30, %c0_31], %36 {strides = array<i32>} : memref<8x1xf32, #tpu.memory_space<vmem>>, vector<8x1xf32>,
    return
  }
  func.func @transform_0(%arg0: i32) -> (i32, i32) {
    %c0_i32 = arith.constant 0 : i32
    %c0_i32_0 = arith.constant 0 : i32
    return %arg0, %c0_i32 : i32, i32
  }
  func.func @transform_1(%arg0: i32) -> (i32, i32) {
    %c0_i32 = arith.constant 0 : i32
    %c0_i32_0 = arith.constant 0 : i32
    return %arg0, %c0_i32 : i32, i32
  }
  func.func @transform_2(%arg0: i32) -> (i32, i32) {
    %c0_i32 = arith.constant 0 : i32
    %c0_i32_0 = arith.constant 0 : i32
    return %arg0, %c0_i32 : i32, i32
  }
  func.func @transform_3(%arg0: i32) -> (i32, i32) {
    %c0_i32 = arith.constant 0 : i32
    %c0_i32_0 = arith.constant 0 : i32
    %c0_i32_1 = arith.constant 0 : i32
    return %c0_i32, %c0_i32_0 : i32, i32
  }
  func.func @transform_4(%arg0: i32) -> (i32, i32) {
    %c0_i32 = arith.constant 0 : i32
    %c0_i32_0 = arith.constant 0 : i32
    %c0_i32_1 = arith.constant 0 : i32
    return %c0_i32, %c0_i32_0 : i32, i32
  }
  func.func @transform_5(%arg0: i32) -> (i32, i32) {
    %c0_i32 = arith.constant 0 : i32
    %c0_i32_0 = arith.constant 0 : i32
    %c0_i32_1 = arith.constant 0 : i32
    return %c0_i32, %c0_i32_0 : i32, i32
  }
  func.func @transform_6(%arg0: i32) -> (i32, i32) {
    %c0_i32 = arith.constant 0 : i32
    %c0_i32_0 = arith.constant 0 : i32
    %c0_i32_1 = arith.constant 0 : i32
    return %c0_i32, %c0_i32_0 : i32, i32
  }
  func.func @transform_7(%arg0: i32) -> (i32, i32) {
    %c0_i32 = arith.constant 0 : i32
    %c0_i32_0 = arith.constant 0 : i32
    %c0_i32_1 = arith.constant 0 : i32
    return %c0_i32, %c0_i32_0 : i32, i32
  }
  func.func @transform_8(%arg0: i32) -> (i32, i32) {
    %c0_i32 = arith.constant 0 : i32
    %c0_i32_0 = arith.constant 0 : i32
    %c0_i32_1 = arith.constant 0 : i32
    return %c0_i32, %c0_i32_0 : i32, i32
  }
  func.func @transform_9(%arg0: i32) -> (i32, i32) {
    %c0_i32 = arith.constant 0 : i32
    %c0_i32_0 = arith.constant 0 : i32
    %c0_i32_1 = arith.constant 0 : i32
    return %c0_i32, %c0_i32_0 : i32, i32
  }
  func.func @transform_10(%arg0: i32) -> (i32, i32) {
    %c0_i32 = arith.constant 0 : i32
    %c0_i32_0 = arith.constant 0 : i32
    %c0_i32_1 = arith.constant 0 : i32
    return %c0_i32, %c0_i32_0 : i32, i32
  }
  func.func @transform_11(%arg0: i32) -> (i32, i32) {
    %c0_i32 = arith.constant 0 : i32
    %c0_i32_0 = arith.constant 0 : i32
    return %arg0, %c0_i32 : i32, i32
  }
}

</mosaic_0001>

<llo_original>
// kernel: ratio_forward.1
$region0: #{ratio_forward.1}
  #allocation0 [shape = 'u32[]', space=smem, size = 0x4, offset = 0x4, fixed_abs, tag = 'smem constant byte address 0x4 - core index']
  #allocation1 [shape = 'u32[144,128]{1,0:T(1,128)}', space=vmem, size = 0x12000, scoped, tag = 'internal scratch']
  #allocation2 [shape = 'f32[8,32]{1,0:T(8,128)}', space=vmem, size = 0x1000, scoped, tag = 'scratch operand']
  #allocation3 [shape = 'f32[1,1]{1,0:T(1,128)S(1)}', space=vmem, size = 0x200, scoped, tag = 'scoped memory for ratio_forward.1']
  %s0 = inlined_call_operand.vmem [shape: f32[16,16], index: 0, kind: input, shape index: {}]
  %s1 = inlined_call_operand.vmem [shape: f32[16,8], index: 1, kind: input, shape index: {}]
  %s2 = inlined_call_operand.vmem [shape: f32[16,8], index: 2, kind: input, shape index: {}]
  %s3 = inlined_call_operand.vmem [shape: bf16[32,128], index: 3, kind: input, shape index: {}]
  %s4 = inlined_call_operand.vmem [shape: f32[1,128], index: 4, kind: input, shape index: {}]
  %s5 = inlined_call_operand.vmem [shape: bf16[128,128], index: 5, kind: input, shape index: {}]
  %s6 = inlined_call_operand.vmem [shape: f32[1,128], index: 6, kind: input, shape index: {}]
  %s7 = inlined_call_operand.hbm [shape: bf16[128,128], index: 7, kind: input, shape index: {}]
  %s8 = inlined_call_operand.vmem [shape: f32[1,128], index: 8, kind: input, shape index: {}]
  %s9 = inlined_call_operand.vmem [shape: f32[1,128], index: 9, kind: input, shape index: {}]
  %s10 = inlined_call_operand.<no memory space> [shape: f32[1,1], index: 10, kind: input, shape index: {}]
  %s11 = inlined_call_operand.vmem [shape: f32[16,1], index: 11, kind: output, shape index: {}]
  %s12 = sld [smem:[#allocation0]]
  $region81: #{ratio_forward.1} parent=0
    _
  %s14 = ssub.s32 1, %s12
  %s15 = scalar_select 0, %s14, %s12
  %v16 = vstv %s10
  %17 = vst [vmem:[#allocation3] sm:$0x1] %v16
  $region1: #{ratio_forward.1} parent=0
    #allocation4 [shape = 'u8[32768]{0}', space=vmem, size = 0x8000, scoped, tag = 'input window, operand 7, single buffered']
    #allocation5 [shape = 's32[2]{0}', space=sflag, size = 0x8, scoped, tag = 'scoped memory for ratio_forward.1']
    %18 = vsyncpa [#allocation5], 0
    loop: start=0, step=1, limit=4
    $region2: #{ratio_forward.1} parent=1 // loop_pre_header
      _
    $region3: #{ratio_forward.1} parent=1 // loop_header
      %s20 = sphi 0, %s24
      %p21 = scmp.ge.s32.totalorder %s20, 4
      %s30 = sphi 0, %s32
      %s33 = sphi 0, %s30
      %s34 = sphi 0, %s33
      %s50 = sphi 0, %s34
      %s56 = sphi 0, %s58
      %s59 = sphi 0, %s56
      %s60 = sphi 0, %s59
      %s76 = sphi 0, %s60
      %s82 = sphi 0, %s84
      %s85 = sphi 0, %s82
      %s86 = sphi 0, %s85
      %s102 = sphi 0, %s86
      %s106 = sphi 0, %s106
      %s108 = sphi 0, %s106
      %s109 = sphi 0, %s108
      %s123 = sphi 0, %s109
      %s127 = sphi 0, %s127
      %s129 = sphi 0, %s127
      %s130 = sphi 0, %s129
      %s144 = sphi 0, %s130
      %s148 = sphi 0, %s148
      %s150 = sphi 0, %s148
      %s151 = sphi 0, %s150
      %s165 = sphi 0, %s151
      %s169 = sphi 0, %s169
      %s171 = sphi 0, %s169
      %s172 = sphi 0, %s171
      %s186 = sphi 0, %s172
      %s190 = sphi 0, %s190
      %s192 = sphi 0, %s190
      %s193 = sphi 0, %s192
      %s207 = sphi 0, %s193
      %s211 = sphi 0, %s211
      %s213 = sphi 0, %s211
      %s214 = sphi 0, %s213
      %s228 = sphi 0, %s214
      %s232 = sphi 0, %s232
      %s234 = sphi 0, %s232
      %s235 = sphi 0, %s234
      %s249 = sphi 0, %s235
      %s253 = sphi 0, %s253
      %s255 = sphi 0, %s253
      %s256 = sphi 0, %s255
      %s270 = sphi 0, %s256
      %s276 = sphi 0, %s278
      %s279 = sphi 0, %s276
      %s280 = sphi 0, %s279
      %s296 = sphi 0, %s280
    $region4: #{ratio_forward.1} parent=1 // loop_header_branch
      %23 = sbr.rel (%p21) target = $region8
    $region5: #{ratio_forward.1} parent=1 // loop_body
      %s25 = ssub.s32 %s20, 1
      %s26 = ssub.s32 %s20, 2
      %s27 = sadd.s32 %s20, 1
      %s28 = ssub.s32 %s20, %s27
      %p29 = scmp.eq.s32.totalorder %s28, 0
      %s31 = sadd.s32 %s30, 1
      %s32 = scalar_select %p29, %s30, %s31
      %p35 = pneg %p29
      %p36 = scmp.eq.s32.totalorder %s20, 1
      %p37 = por %p35, %p36
      %p38 = scmp.ne.s32.totalorder %s30, %s33
      %p39 = scmp.eq.s32.totalorder %s20, 0
      %p40 = por %p38, %p39
      %p41 = scmp.ne.s32.totalorder %s30, %s33
      %p42 = scmp.eq.s32.totalorder %s25, 1
      %p43 = por %p41, %p42
      %p44 = scmp.ne.s32.totalorder %s33, %s34
      %p45 = scmp.eq.s32.totalorder %s25, 0
      %p46 = por %p44, %p45
      %p47 = scmp.ne.s32.totalorder %s33, %s34
      %p48 = scmp.eq.s32.totalorder %s26, 1
      %p49 = por %p47, %p48
      %p51 = scmp.ne.s32.totalorder %s34, %s50
      %p52 = scmp.eq.s32.totalorder %s26, 0
      %p53 = por %p51, %p52
      %s54 = ssub.s32 %s20, %s27
      %p55 = scmp.eq.s32.totalorder %s54, 0
      %s57 = sadd.s32 %s56, 1
      %s58 = scalar_select %p55, %s56, %s57
      %p61 = pneg %p55
      %p62 = scmp.eq.s32.totalorder %s20, 1
      %p63 = por %p61, %p62
      %p64 = scmp.ne.s32.totalorder %s56, %s59
      %p65 = scmp.eq.s32.totalorder %s20, 0
      %p66 = por %p64, %p65
      %p67 = scmp.ne.s32.totalorder %s56, %s59
      %p68 = scmp.eq.s32.totalorder %s25, 1
      %p69 = por %p67, %p68
      %p70 = scmp.ne.s32.totalorder %s59, %s60
      %p71 = scmp.eq.s32.totalorder %s25, 0
      %p72 = por %p70, %p71
      %p73 = scmp.ne.s32.totalorder %s59, %s60
      %p74 = scmp.eq.s32.totalorder %s26, 1
      %p75 = por %p73, %p74
      %p77 = scmp.ne.s32.totalorder %s60, %s76
      %p78 = scmp.eq.s32.totalorder %s26, 0
      %p79 = por %p77, %p78
      %s80 = ssub.s32 %s20, %s27
      %p81 = scmp.eq.s32.totalorder %s80, 0
      %s83 = sadd.s32 %s82, 1
      %s84 = scalar_select %p81, %s82, %s83
      %p87 = pneg %p81
      %p88 = scmp.eq.s32.totalorder %s20, 1
      %p89 = por %p87, %p88
      %p90 = scmp.ne.s32.totalorder %s82, %s85
      %p91 = scmp.eq.s32.totalorder %s20, 0
      %p92 = por %p90, %p91
      %p93 = scmp.ne.s32.totalorder %s82, %s85
      %p94 = scmp.eq.s32.totalorder %s25, 1
      %p95 = por %p93, %p94
      %p96 = scmp.ne.s32.totalorder %s85, %s86
      %p97 = scmp.eq.s32.totalorder %s25, 0
      %p98 = por %p96, %p97
      %p99 = scmp.ne.s32.totalorder %s85, %s86
      %p100 = scmp.eq.s32.totalorder %s26, 1
      %p101 = por %p99, %p100
      %p103 = scmp.ne.s32.totalorder %s86, %s102
      %p104 = scmp.eq.s32.totalorder %s26, 0
      %p105 = por %p103, %p104
      %s107 = sadd.s32 %s106, 1
      %p110 = scmp.eq.s32.totalorder %s20, 1
      %p111 = scmp.ne.s32.totalorder %s106, %s108
      %p112 = scmp.eq.s32.totalorder %s20, 0
      %p113 = por %p111, %p112
      %p114 = scmp.ne.s32.totalorder %s106, %s108
      %p115 = scmp.eq.s32.totalorder %s25, 1
      %p116 = por %p114, %p115
      %p117 = scmp.ne.s32.totalorder %s108, %s109
      %p118 = scmp.eq.s32.totalorder %s25, 0
      %p119 = por %p117, %p118
      %p120 = scmp.ne.s32.totalorder %s108, %s109
      %p121 = scmp.eq.s32.totalorder %s26, 1
      %p122 = por %p120, %p121
      %p124 = scmp.ne.s32.totalorder %s109, %s123
      %p125 = scmp.eq.s32.totalorder %s26, 0
      %p126 = por %p124, %p125
      %s128 = sadd.s32 %s127, 1
      %p131 = scmp.eq.s32.totalorder %s20, 1
      %p132 = scmp.ne.s32.totalorder %s127, %s129
      %p133 = scmp.eq.s32.totalorder %s20, 0
      %p134 = por %p132, %p133
      %p135 = scmp.ne.s32.totalorder %s127, %s129
      %p136 = scmp.eq.s32.totalorder %s25, 1
      %p137 = por %p135, %p136
      %p138 = scmp.ne.s32.totalorder %s129, %s130
      %p139 = scmp.eq.s32.totalorder %s25, 0
      %p140 = por %p138, %p139
      %p141 = scmp.ne.s32.totalorder %s129, %s130
      %p142 = scmp.eq.s32.totalorder %s26, 1
      %p143 = por %p141, %p142
      %p145 = scmp.ne.s32.totalorder %s130, %s144
      %p146 = scmp.eq.s32.totalorder %s26, 0
      %p147 = por %p145, %p146
      %s149 = sadd.s32 %s148, 1
      %p152 = scmp.eq.s32.totalorder %s20, 1
      %p153 = scmp.ne.s32.totalorder %s148, %s150
      %p154 = scmp.eq.s32.totalorder %s20, 0
      %p155 = por %p153, %p154
      %p156 = scmp.ne.s32.totalorder %s148, %s150
      %p157 = scmp.eq.s32.totalorder %s25, 1
      %p158 = por %p156, %p157
      %p159 = scmp.ne.s32.totalorder %s150, %s151
      %p160 = scmp.eq.s32.totalorder %s25, 0
      %p161 = por %p159, %p160
      %p162 = scmp.ne.s32.totalorder %s150, %s151
      %p163 = scmp.eq.s32.totalorder %s26, 1
      %p164 = por %p162, %p163
      %p166 = scmp.ne.s32.totalorder %s151, %s165
      %p167 = scmp.eq.s32.totalorder %s26, 0
      %p168 = por %p166, %p167
      %s170 = sadd.s32 %s169, 1
      %p173 = scmp.eq.s32.totalorder %s20, 1
      %p174 = scmp.ne.s32.totalorder %s169, %s171
      %p175 = scmp.eq.s32.totalorder %s20, 0
      %p176 = por %p174, %p175
      %p177 = scmp.ne.s32.totalorder %s169, %s171
      %p178 = scmp.eq.s32.totalorder %s25, 1
      %p179 = por %p177, %p178
      %p180 = scmp.ne.s32.totalorder %s171, %s172
      %p181 = scmp.eq.s32.totalorder %s25, 0
      %p182 = por %p180, %p181
      %p183 = scmp.ne.s32.totalorder %s171, %s172
      %p184 = scmp.eq.s32.totalorder %s26, 1
      %p185 = por %p183, %p184
      %p187 = scmp.ne.s32.totalorder %s172, %s186
      %p188 = scmp.eq.s32.totalorder %s26, 0
      %p189 = por %p187, %p188
      %s191 = sadd.s32 %s190, 1
      %p194 = scmp.eq.s32.totalorder %s20, 1
      %p195 = scmp.ne.s32.totalorder %s190, %s192
      %p196 = scmp.eq.s32.totalorder %s20, 0
      %p197 = por %p195, %p196
      %p198 = scmp.ne.s32.totalorder %s190, %s192
      %p199 = scmp.eq.s32.totalorder %s25, 1
      %p200 = por %p198, %p199
      %p201 = scmp.ne.s32.totalorder %s192, %s193
      %p202 = scmp.eq.s32.totalorder %s25, 0
      %p203 = por %p201, %p202
      %p204 = scmp.ne.s32.totalorder %s192, %s193
      %p205 = scmp.eq.s32.totalorder %s26, 1
      %p206 = por %p204, %p205
      %p208 = scmp.ne.s32.totalorder %s193, %s207
      %p209 = scmp.eq.s32.totalorder %s26, 0
      %p210 = por %p208, %p209
      %s212 = sadd.s32 %s211, 1
      %p215 = scmp.eq.s32.totalorder %s20, 1
      %p216 = scmp.ne.s32.totalorder %s211, %s213
      %p217 = scmp.eq.s32.totalorder %s20, 0
      %p218 = por %p216, %p217
      %p219 = scmp.ne.s32.totalorder %s211, %s213
      %p220 = scmp.eq.s32.totalorder %s25, 1
      %p221 = por %p219, %p220
      %p222 = scmp.ne.s32.totalorder %s213, %s214
      %p223 = scmp.eq.s32.totalorder %s25, 0
      %p224 = por %p222, %p223
      %p225 = scmp.ne.s32.totalorder %s213, %s214
      %p226 = scmp.eq.s32.totalorder %s26, 1
      %p227 = por %p225, %p226
      %p229 = scmp.ne.s32.totalorder %s214, %s228
      %p230 = scmp.eq.s32.totalorder %s26, 0
      %p231 = por %p229, %p230
      %s233 = sadd.s32 %s232, 1
      %p236 = scmp.eq.s32.totalorder %s20, 1
      %p237 = scmp.ne.s32.totalorder %s232, %s234
      %p238 = scmp.eq.s32.totalorder %s20, 0
      %p239 = por %p237, %p238
      %p240 = scmp.ne.s32.totalorder %s232, %s234
      %p241 = scmp.eq.s32.totalorder %s25, 1
      %p242 = por %p240, %p241
      %p243 = scmp.ne.s32.totalorder %s234, %s235
      %p244 = scmp.eq.s32.totalorder %s25, 0
      %p245 = por %p243, %p244
      %p246 = scmp.ne.s32.totalorder %s234, %s235
      %p247 = scmp.eq.s32.totalorder %s26, 1
      %p248 = por %p246, %p247
      %p250 = scmp.ne.s32.totalorder %s235, %s249
      %p251 = scmp.eq.s32.totalorder %s26, 0
      %p252 = por %p250, %p251
      %s254 = sadd.s32 %s253, 1
      %p257 = scmp.eq.s32.totalorder %s20, 1
      %p258 = scmp.ne.s32.totalorder %s253, %s255
      %p259 = scmp.eq.s32.totalorder %s20, 0
      %p260 = por %p258, %p259
      %p261 = scmp.ne.s32.totalorder %s253, %s255
      %p262 = scmp.eq.s32.totalorder %s25, 1
      %p263 = por %p261, %p262
      %p264 = scmp.ne.s32.totalorder %s255, %s256
      %p265 = scmp.eq.s32.totalorder %s25, 0
      %p266 = por %p264, %p265
      %p267 = scmp.ne.s32.totalorder %s255, %s256
      %p268 = scmp.eq.s32.totalorder %s26, 1
      %p269 = por %p267, %p268
      %p271 = scmp.ne.s32.totalorder %s256, %s270
      %p272 = scmp.eq.s32.totalorder %s26, 0
      %p273 = por %p271, %p272
      %s274 = ssub.s32 %s20, %s27
      %p275 = scmp.eq.s32.totalorder %s274, 0
      %s277 = sadd.s32 %s276, 1
      %s278 = scalar_select %p275, %s276, %s277
      %p281 = pneg %p275
      %p282 = scmp.eq.s32.totalorder %s20, 1
      %p283 = por %p281, %p282
      %p284 = scmp.ne.s32.totalorder %s276, %s279
      %p285 = scmp.eq.s32.totalorder %s20, 0
      %p286 = por %p284, %p285
      %p287 = scmp.ne.s32.totalorder %s276, %s279
      %p288 = scmp.eq.s32.totalorder %s25, 1
      %p289 = por %p287, %p288
      %p290 = scmp.ne.s32.totalorder %s279, %s280
      %p291 = scmp.eq.s32.totalorder %s25, 0
      %p292 = por %p290, %p291
      %p293 = scmp.ne.s32.totalorder %s279, %s280
      %p294 = scmp.eq.s32.totalorder %s26, 1
      %p295 = por %p293, %p294
      %p297 = scmp.ne.s32.totalorder %s280, %s296
      %p298 = scmp.eq.s32.totalorder %s26, 0
      %p299 = por %p297, %p298
      %p300 = scmp.le.s32.totalorder 1, %s20
      %p301 = scmp.lt.s32.totalorder %s20, 3
      %p302 = pnand %p300, %p301
      %p303 = pneg %p302
      // Predicated region
      $region9: #{ratio_forward.1} parent=5 // pred_check
        _
      $region10: #{ratio_forward.1} parent=5 // pred_check_branch
        %305 = sbr.rel (%p302) target = $region12
      $region11: #{ratio_forward.1} parent=5 // pred_region
        %s306 = ssub.s32 %s20, 1
        // Predicated region
        $region13: #{ratio_forward.1} parent=11 // pred_check
          %p307 = pneg %p119
        $region14: #{ratio_forward.1} parent=11 // pred_check_branch
          %309 = sbr.rel (%p307) target = $region16
        $region15: #{ratio_forward.1} parent=11 // pred_region
          _
        $region16: #{ratio_forward.1} parent=11 // pred_fallthru
          _
        // Predicated region
        $region17: #{ratio_forward.1} parent=11 // pred_check
          %p310 = pneg %p140
        $region18: #{ratio_forward.1} parent=11 // pred_check_branch
          %312 = sbr.rel (%p310) target = $region20
        $region19: #{ratio_forward.1} parent=11 // pred_region
          _
        $region20: #{ratio_forward.1} parent=11 // pred_fallthru
          _
        // Predicated region
        $region21: #{ratio_forward.1} parent=11 // pred_check
          %p313 = pneg %p161
        $region22: #{ratio_forward.1} parent=11 // pred_check_branch
          %315 = sbr.rel (%p313) target = $region24
        $region23: #{ratio_forward.1} parent=11 // pred_region
          _
        $region24: #{ratio_forward.1} parent=11 // pred_fallthru
          _
        // Predicated region
        $region25: #{ratio_forward.1} parent=11 // pred_check
          %p316 = pneg %p182
        $region26: #{ratio_forward.1} parent=11 // pred_check_branch
          %318 = sbr.rel (%p316) target = $region28
        $region27: #{ratio_forward.1} parent=11 // pred_region
          _
        $region28: #{ratio_forward.1} parent=11 // pred_fallthru
          _
        // Predicated region
        $region29: #{ratio_forward.1} parent=11 // pred_check
          %p319 = pneg %p203
        $region30: #{ratio_forward.1} parent=11 // pred_check_branch
          %321 = sbr.rel (%p319) target = $region32
        $region31: #{ratio_forward.1} parent=11 // pred_region
          %s323 = ssub.s32 1024, 1024
          %324 = vsyncadd [#allocation5], %s323
          %s325 = sshll.u32 [#allocation4], 4
          %s326 = int_to_ptr.vmem [resolvable:$true] %s325
          %331 = dma.hbm_to_vmem [thread:$0]  %s7, 1024, %s326, [#allocation5], 64, 64, 4
        $region32: #{ratio_forward.1} parent=11 // pred_fallthru
          _
        // Predicated region
        $region33: #{ratio_forward.1} parent=11 // pred_check
          %p332 = pneg %p224
        $region34: #{ratio_forward.1} parent=11 // pred_check_branch
          %334 = sbr.rel (%p332) target = $region36
        $region35: #{ratio_forward.1} parent=11 // pred_region
          _
        $region36: #{ratio_forward.1} parent=11 // pred_fallthru
          _
        // Predicated region
        $region37: #{ratio_forward.1} parent=11 // pred_check
          %p335 = pneg %p245
        $region38: #{ratio_forward.1} parent=11 // pred_check_branch
          %337 = sbr.rel (%p335) target = $region40
        $region39: #{ratio_forward.1} parent=11 // pred_region
          _
        $region40: #{ratio_forward.1} parent=11 // pred_fallthru
          _
        // Predicated region
        $region41: #{ratio_forward.1} parent=11 // pred_check
          %p338 = pneg %p266
        $region42: #{ratio_forward.1} parent=11 // pred_check_branch
          %340 = sbr.rel (%p338) target = $region44
        $region43: #{ratio_forward.1} parent=11 // pred_region
          _
        $region44: #{ratio_forward.1} parent=11 // pred_fallthru
          _
      $region12: #{ratio_forward.1} parent=5 // pred_fallthru
        _
      %p341 = scmp.lt.s32.totalorder %s20, 2
      // Predicated region
      $region45: #{ratio_forward.1} parent=5 // pred_check
        %p342 = pneg %p341
      $region46: #{ratio_forward.1} parent=5 // pred_check_branch
        %344 = sbr.rel (%p342) target = $region48
      $region47: #{ratio_forward.1} parent=5 // pred_region
        // Predicated region
        $region49: #{ratio_forward.1} parent=47 // pred_check
          %p345 = pneg %p40
        $region50: #{ratio_forward.1} parent=47 // pred_check_branch
          %347 = sbr.rel (%p345) target = $region52
        $region51: #{ratio_forward.1} parent=47 // pred_region
          %p348 = scmp.lt.s32.totalorder %s20, 1
          %s349 = scalar_select %p348, %s20, 1
          %s350 = smul.addr %s349, 8
          %s351 = scalar_lea.vmem %s0, %s350
        $region52: #{ratio_forward.1} parent=47 // pred_fallthru
          _
        // Predicated region
        $region53: #{ratio_forward.1} parent=47 // pred_check
          %p352 = pneg %p66
        $region54: #{ratio_forward.1} parent=47 // pred_check_branch
          %354 = sbr.rel (%p352) target = $region56
        $region55: #{ratio_forward.1} parent=47 // pred_region
          %p355 = scmp.lt.s32.totalorder %s20, 1
          %s356 = scalar_select %p355, %s20, 1
          %s357 = smul.addr %s356, 8
          %s358 = scalar_lea.vmem %s1, %s357
        $region56: #{ratio_forward.1} parent=47 // pred_fallthru
          _
        // Predicated region
        $region57: #{ratio_forward.1} parent=47 // pred_check
          %p359 = pneg %p92
        $region58: #{ratio_forward.1} parent=47 // pred_check_branch
          %361 = sbr.rel (%p359) target = $region60
        $region59: #{ratio_forward.1} parent=47 // pred_region
          %p362 = scmp.lt.s32.totalorder %s20, 1
          %s363 = scalar_select %p362, %s20, 1
          %s364 = smul.addr %s363, 8
          %s365 = scalar_lea.vmem %s2, %s364
        $region60: #{ratio_forward.1} parent=47 // pred_fallthru
          _
      $region48: #{ratio_forward.1} parent=5 // pred_fallthru
        _
      %p366 = scmp.le.s32.totalorder 1, %s20
      %p367 = scmp.lt.s32.totalorder %s20, 3
      %p368 = pnand %p366, %p367
      %p369 = pneg %p368
      // Predicated region
      $region61: #{ratio_forward.1} parent=5 // pred_check
        _
      $region62: #{ratio_forward.1} parent=5 // pred_check_branch
        %371 = sbr.rel (%p368) target = $region64
      $region63: #{ratio_forward.1} parent=5 // pred_region
        %s372 = ssub.s32 %s20, 1
        // Predicated region
        $region65: #{ratio_forward.1} parent=63 // pred_check
          %p373 = pneg %p203
        $region66: #{ratio_forward.1} parent=63 // pred_check_branch
          %375 = sbr.rel (%p373) target = $region68
        $region67: #{ratio_forward.1} parent=63 // pred_region
          %376 = dma.done [#allocation5], 1024
        $region68: #{ratio_forward.1} parent=63 // pred_fallthru
          _
        %p377 = scmp.lt.s32.totalorder %s25, 1
        %s378 = scalar_select %p377, %s25, 1
        %s379 = smul.addr %s378, 8
        %s380 = scalar_lea.vmem %s0, %s379
        %p381 = pneg %p46
        %p382 = pneg %p43
        %p383 = scmp.lt.s32.totalorder %s25, 1
        %s384 = scalar_select %p383, %s25, 1
        %s385 = smul.addr %s384, 8
        %s386 = scalar_lea.vmem %s1, %s385
        %p387 = pneg %p72
        %p388 = pneg %p69
        %p389 = scmp.lt.s32.totalorder %s25, 1
        %s390 = scalar_select %p389, %s25, 1
        %s391 = smul.addr %s390, 8
        %s392 = scalar_lea.vmem %s2, %s391
        %p393 = pneg %p98
        %p394 = pneg %p95
        %p395 = pneg %p119
        %p396 = pneg %p116
        %p397 = pneg %p140
        %p398 = pneg %p137
        %p399 = pneg %p161
        %p400 = pneg %p158
        %p401 = pneg %p182
        %p402 = pneg %p179
        %p403 = pneg %p203
        %p404 = pneg %p200
        %p405 = pneg %p224
        %p406 = pneg %p221
        %p407 = pneg %p245
        %p408 = pneg %p242
        %p409 = pneg %p266
        %p410 = pneg %p263
        %p411 = pneg %p292
        %p412 = pneg %p289
        %p413 = scmp.lt.s32.totalorder %s25, 1
        %s414 = scalar_select %p413, %s25, 1
        %s415 = smul.addr %s414, 8
        %s416 = scalar_lea.vmem %s11, %s415
        %p417 = scmp.lt.s32.totalorder %s25, 1
        %s418 = scalar_select %p417, %s25, 1
        %s419 = smul.addr %s418, 8
        %s420 = scalar_lea.vmem %s0, %s419
        %p421 = scmp.lt.s32.totalorder %s25, 1
        %s422 = scalar_select %p421, %s25, 1
        %s423 = smul.addr %s422, 8
        %s424 = scalar_lea.vmem %s1, %s423
        %p425 = scmp.lt.s32.totalorder %s25, 1
        %s426 = scalar_select %p425, %s25, 1
        %s427 = smul.addr %s426, 8
        %s428 = scalar_lea.vmem %s2, %s427
        %p429 = scmp.lt.s32.totalorder %s25, 1
        %s430 = scalar_select %p429, %s25, 1
        %s431 = smul.addr %s430, 8
        %s432 = scalar_lea.vmem %s11, %s431
        %v434 = vld [vmem:[%s420] sm:$0xff]
        %vm435 = vcmask 130048
        %436 = vst.msk [vmem:[#allocation2] sm:$0xff] %vm435, %v434
        %v437 = vld [vmem:[%s424] sm:$0xff]
        %439 = vrot.lane.b32.xlu0 %v437, 16
        %v440 = vpop.permute.xlu0 %439
        %vm442 = vcmask 195712
        %443 = vst.msk [vmem:[#allocation2] sm:$0xff] %vm442, %v440
        %v444 = vld [vmem:[%s428] sm:$0xff]
        %446 = vrot.lane.b32.xlu0 %v444, 24
        %v447 = vpop.permute.xlu0 %446
        %vm449 = vcmask 261312
        %450 = vst.msk [vmem:[#allocation2] sm:$0xff] %vm449, %v447
        %v451 = vld [vmem:[#allocation2] sm:$0xff]
        %v452 = vpack.c.bf16 %v451, %v451
        %v453 = vld [vmem:[%s3] sm:$0xf]
        %v454 = vld [vmem:[%s3 + $0x4] sm:$0xf]
        %v455 = vld [vmem:[%s3 + $0x8] sm:$0xf]
        %v456 = vld [vmem:[%s3 + $0xc] sm:$0xf]
        %v457 = vld [vmem:[%s4] sm:$0x1]
        %v459 = vlaneseq
        %v460 = vshrl.u32 %v459, 7
        %v461 = vsub.s32 0, %v460
        %v462 = vrot.slane %v457, %v461
        %v468 = vunpack.c.l.b16 %v453
        %v469 = vunpack.c.l.b16 %v454
        %v470 = vunpack.c.l.b16 %v455
        %v471 = vunpack.c.l.b16 %v456
        %v472 = vpack.c.b16 %v469, %v468
        %v473 = vpack.c.b16 %v471, %v470
        %vm476 = vcmask 261120
        %v478 = vsel %vm476, %v452, 0
        %480 = vmatprep.subr.bf16.mxu0 0
        %481 = vmatpush1.bf16.msra.mxu0 %v472
        %482 = vmatprep.subr.bf16.mxu0 0
        %483 = vmatpush1.bf16.msra.mxu0 %v473
        %484 = vmatprep.subr.bf16.mxu0 0
        %485 = vmatpush1.bf16.msra.mxu0 0
        %486 = vmatprep.subr.bf16.mxu0 0
        %487 = vmatpush1.bf16.msra.mxu0 0
        %488 = vmatprep.subr.bf16.mxu0 0
        %489 = vmatpush1.bf16.msra.mxu0 0
        %490 = vmatprep.subr.bf16.mxu0 0
        %491 = vmatpush1.bf16.msra.mxu0 0
        %492 = vmatprep.subr.bf16.mxu0 0
        %493 = vmatpush1.bf16.msra.mxu0 0
        %494 = vmatprep.subr.bf16.mxu0 0
        %495 = vmatpush1.bf16.msra.mxu0 0
        %496 = vmatprep.subr.bf16.mxu0 0
        %497 = vmatpush1.bf16.msra.mxu0 0
        %498 = vmatprep.subr.bf16.mxu0 0
        %499 = vmatpush1.bf16.msra.mxu0 0
        %500 = vmatprep.subr.bf16.mxu0 0
        %501 = vmatpush1.bf16.msra.mxu0 0
        %502 = vmatprep.subr.bf16.mxu0 0
        %503 = vmatpush1.bf16.msra.mxu0 0
        %504 = vmatprep.subr.bf16.mxu0 0
        %505 = vmatpush1.bf16.msra.mxu0 0
        %506 = vmatprep.subr.bf16.mxu0 0
        %507 = vmatpush1.bf16.msra.mxu0 0
        %508 = vmatprep.subr.bf16.mxu0 0
        %509 = vmatpush1.bf16.msra.mxu0 0
        %510 = vmatprep.subr.bf16.mxu0 0
        %511 = vmatpush1.bf16.msra.mxu0 0
        %512 = vmatprep.mubr.bf16.mxu0 0
        %513 = vmatmul.mubr.bf16.gmra.mrb[0].mxu0 %v478
        %v514 = vpop.f32.mrb[0].mxu0
        %v515 = vadd.f32 %v462, %v514
        %v516 = vpop.f32.mrb[0].mxu0
        %v517 = vpop.f32.mrb[0].mxu0
        %v518 = vpop.f32.mrb[0].mxu0
        %519 = vdwg.mxu0
        %v520 = vtanh.pop %v515
        %v521 = vpack.c.bf16 %v520, %v520
        %v522 = vld [vmem:[%s5] sm:$0xf]
        %v523 = vld [vmem:[%s5 + $0x4] sm:$0xf]
        %v524 = vld [vmem:[%s5 + $0x8] sm:$0xf]
        %v525 = vld [vmem:[%s5 + $0xc] sm:$0xf]
        %v526 = vld [vmem:[%s5 + $0x10] sm:$0xf]
        %v527 = vld [vmem:[%s5 + $0x14] sm:$0xf]
        %v528 = vld [vmem:[%s5 + $0x18] sm:$0xf]
        %v529 = vld [vmem:[%s5 + $0x1c] sm:$0xf]
        %v530 = vld [vmem:[%s5 + $0x20] sm:$0xf]
        %v531 = vld [vmem:[%s5 + $0x24] sm:$0xf]
        %v532 = vld [vmem:[%s5 + $0x28] sm:$0xf]
        %v533 = vld [vmem:[%s5 + $0x2c] sm:$0xf]
        %v534 = vld [vmem:[%s5 + $0x30] sm:$0xf]
        %v535 = vld [vmem:[%s5 + $0x34] sm:$0xf]
        %v536 = vld [vmem:[%s5 + $0x38] sm:$0xf]
        %v537 = vld [vmem:[%s5 + $0x3c] sm:$0xf]
        %v538 = vld [vmem:[%s6] sm:$0x1]
        %v540 = vlaneseq
        %v541 = vshrl.u32 %v540, 7
        %v542 = vsub.s32 0, %v541
        %v543 = vrot.slane %v538, %v542
        %v561 = vunpack.c.l.b16 %v522
        %v562 = vunpack.c.l.b16 %v523
        %v563 = vunpack.c.l.b16 %v524
        %v564 = vunpack.c.l.b16 %v525
        %v565 = vunpack.c.l.b16 %v526
        %v566 = vunpack.c.l.b16 %v527
        %v567 = vunpack.c.l.b16 %v528
        %v568 = vunpack.c.l.b16 %v529
        %v569 = vunpack.c.l.b16 %v530
        %v570 = vunpack.c.l.b16 %v531
        %v571 = vunpack.c.l.b16 %v532
        %v572 = vunpack.c.l.b16 %v533
        %v573 = vunpack.c.l.b16 %v534
        %v574 = vunpack.c.l.b16 %v535
        %v575 = vunpack.c.l.b16 %v536
        %v576 = vunpack.c.l.b16 %v537
        %v577 = vpack.c.b16 %v562, %v561
        %v578 = vpack.c.b16 %v564, %v563
        %v579 = vpack.c.b16 %v566, %v565
        %v580 = vpack.c.b16 %v568, %v567
        %v581 = vpack.c.b16 %v570, %v569
        %v582 = vpack.c.b16 %v572, %v571
        %v583 = vpack.c.b16 %v574, %v573
        %v584 = vpack.c.b16 %v576, %v575
        %593 = vmatprep.subr.bf16.mxu0 0
        %594 = vmatpush1.bf16.msra.mxu0 %v577
        %595 = vmatprep.subr.bf16.mxu0 0
        %596 = vmatpush1.bf16.msra.mxu0 %v578
        %597 = vmatprep.subr.bf16.mxu0 0
        %598 = vmatpush1.bf16.msra.mxu0 %v579
        %599 = vmatprep.subr.bf16.mxu0 0
        %600 = vmatpush1.bf16.msra.mxu0 %v580
        %601 = vmatprep.subr.bf16.mxu0 0
        %602 = vmatpush1.bf16.msra.mxu0 %v581
        %603 = vmatprep.subr.bf16.mxu0 0
        %604 = vmatpush1.bf16.msra.mxu0 %v582
        %605 = vmatprep.subr.bf16.mxu0 0
        %606 = vmatpush1.bf16.msra.mxu0 %v583
        %607 = vmatprep.subr.bf16.mxu0 0
        %608 = vmatpush1.bf16.msra.mxu0 %v584
        %609 = vmatprep.subr.bf16.mxu0 0
        %610 = vmatpush1.bf16.msra.mxu0 0
        %611 = vmatprep.subr.bf16.mxu0 0
        %612 = vmatpush1.bf16.msra.mxu0 0
        %613 = vmatprep.subr.bf16.mxu0 0
        %614 = vmatpush1.bf16.msra.mxu0 0
        %615 = vmatprep.subr.bf16.mxu0 0
        %616 = vmatpush1.bf16.msra.mxu0 0
        %617 = vmatprep.subr.bf16.mxu0 0
        %618 = vmatpush1.bf16.msra.mxu0 0
        %619 = vmatprep.subr.bf16.mxu0 0
        %620 = vmatpush1.bf16.msra.mxu0 0
        %621 = vmatprep.subr.bf16.mxu0 0
        %622 = vmatpush1.bf16.msra.mxu0 0
        %623 = vmatprep.subr.bf16.mxu0 0
        %624 = vmatpush1.bf16.msra.mxu0 0
        %625 = vmatprep.mubr.bf16.mxu0 0
        %626 = vmatmul.mubr.bf16.gmra.mrb[0].mxu0 %v521
        %v627 = vpop.f32.mrb[0].mxu0
        %v628 = vadd.f32 %v543, %v627
        %v629 = vpop.f32.mrb[0].mxu0
        %v630 = vpop.f32.mrb[0].mxu0
        %v631 = vpop.f32.mrb[0].mxu0
        %632 = vdwg.mxu0
        %v633 = vtanh.pop %v628
        %v634 = vpack.c.bf16 %v633, %v633
        %v635 = vld [vmem:[#allocation4] sm:$0xf]
        %v636 = vld [vmem:[#allocation4 + $0x4] sm:$0xf]
        %v637 = vld [vmem:[#allocation4 + $0x8] sm:$0xf]
        %v638 = vld [vmem:[#allocation4 + $0xc] sm:$0xf]
        %v639 = vld [vmem:[#allocation4 + $0x10] sm:$0xf]
        %v640 = vld [vmem:[#allocation4 + $0x14] sm:$0xf]
        %v641 = vld [vmem:[#allocation4 + $0x18] sm:$0xf]
        %v642 = vld [vmem:[#allocation4 + $0x1c] sm:$0xf]
        %v643 = vld [vmem:[#allocation4 + $0x20] sm:$0xf]
        %v644 = vld [vmem:[#allocation4 + $0x24] sm:$0xf]
        %v645 = vld [vmem:[#allocation4 + $0x28] sm:$0xf]
        %v646 = vld [vmem:[#allocation4 + $0x2c] sm:$0xf]
        %v647 = vld [vmem:[#allocation4 + $0x30] sm:$0xf]
        %v648 = vld [vmem:[#allocation4 + $0x34] sm:$0xf]
        %v649 = vld [vmem:[#allocation4 + $0x38] sm:$0xf]
        %v650 = vld [vmem:[#allocation4 + $0x3c] sm:$0xf]
        %v651 = vld [vmem:[%s8] sm:$0x1]
        %v653 = vlaneseq
        %v654 = vshrl.u32 %v653, 7
        %v655 = vsub.s32 0, %v654
        %v656 = vrot.slane %v651, %v655
        %v674 = vunpack.c.l.b16 %v635
        %v675 = vunpack.c.l.b16 %v636
        %v676 = vunpack.c.l.b16 %v637
        %v677 = vunpack.c.l.b16 %v638
        %v678 = vunpack.c.l.b16 %v639
        %v679 = vunpack.c.l.b16 %v640
        %v680 = vunpack.c.l.b16 %v641
        %v681 = vunpack.c.l.b16 %v642
        %v682 = vunpack.c.l.b16 %v643
        %v683 = vunpack.c.l.b16 %v644
        %v684 = vunpack.c.l.b16 %v645
        %v685 = vunpack.c.l.b16 %v646
        %v686 = vunpack.c.l.b16 %v647
        %v687 = vunpack.c.l.b16 %v648
        %v688 = vunpack.c.l.b16 %v649
        %v689 = vunpack.c.l.b16 %v650
        %v690 = vpack.c.b16 %v675, %v674
        %v691 = vpack.c.b16 %v677, %v676
        %v692 = vpack.c.b16 %v679, %v678
        %v693 = vpack.c.b16 %v681, %v680
        %v694 = vpack.c.b16 %v683, %v682
        %v695 = vpack.c.b16 %v685, %v684
        %v696 = vpack.c.b16 %v687, %v686
        %v697 = vpack.c.b16 %v689, %v688
        %706 = vmatprep.subr.bf16.mxu0 0
        %707 = vmatpush1.bf16.msra.mxu0 %v690
        %708 = vmatprep.subr.bf16.mxu0 0
        %709 = vmatpush1.bf16.msra.mxu0 %v691
        %710 = vmatprep.subr.bf16.mxu0 0
        %711 = vmatpush1.bf16.msra.mxu0 %v692
        %712 = vmatprep.subr.bf16.mxu0 0
        %713 = vmatpush1.bf16.msra.mxu0 %v693
        %714 = vmatprep.subr.bf16.mxu0 0
        %715 = vmatpush1.bf16.msra.mxu0 %v694
        %716 = vmatprep.subr.bf16.mxu0 0
        %717 = vmatpush1.bf16.msra.mxu0 %v695
        %718 = vmatprep.subr.bf16.mxu0 0
        %719 = vmatpush1.bf16.msra.mxu0 %v696
        %720 = vmatprep.subr.bf16.mxu0 0
        %721 = vmatpush1.bf16.msra.mxu0 %v697
        %722 = vmatprep.subr.bf16.mxu0 0
        %723 = vmatpush1.bf16.msra.mxu0 0
        %724 = vmatprep.subr.bf16.mxu0 0
        %725 = vmatpush1.bf16.msra.mxu0 0
        %726 = vmatprep.subr.bf16.mxu0 0
        %727 = vmatpush1.bf16.msra.mxu0 0
        %728 = vmatprep.subr.bf16.mxu0 0
        %729 = vmatpush1.bf16.msra.mxu0 0
        %730 = vmatprep.subr.bf16.mxu0 0
        %731 = vmatpush1.bf16.msra.mxu0 0
        %732 = vmatprep.subr.bf16.mxu0 0
        %733 = vmatpush1.bf16.msra.mxu0 0
        %734 = vmatprep.subr.bf16.mxu0 0
        %735 = vmatpush1.bf16.msra.mxu0 0
        %736 = vmatprep.subr.bf16.mxu0 0
        %737 = vmatpush1.bf16.msra.mxu0 0
        %738 = vmatprep.mubr.bf16.mxu0 0
        %739 = vmatmul.mubr.bf16.gmra.mrb[0].mxu0 %v634
        %v740 = vpop.f32.mrb[0].mxu0
        %v741 = vadd.f32 %v656, %v740
        %v742 = vpop.f32.mrb[0].mxu0
        %v743 = vpop.f32.mrb[0].mxu0
        %v744 = vpop.f32.mrb[0].mxu0
        %745 = vdwg.mxu0
        %v746 = vtanh.pop %v741
        %v747 = vld [vmem:[%s9] sm:$0x1]
        %v749 = vlaneseq
        %v750 = vshrl.u32 %v749, 7
        %v751 = vsub.s32 0, %v750
        %v752 = vrot.slane %v747, %v751
        %v754 = vmul.f32 %v746, %v752
        %755 = vadd.xlane.f32.xlu0 %v754
        %v756 = vpop.xlane.xlu0 %755
        %v757 = vld [vmem:[#allocation3] sm:$0x1]
        %v759 = vlaneseq
        %v760 = vshrl.u32 %v759, 7
        %v761 = vsub.s32 0, %v760
        %v762 = vrot.slane %v757, %v761
        %v764 = vadd.f32 %v756, %v762
        %v765 = vmul.f32 %v764, 1.442695
        %v766 = vpow.pop %v765
        %vm767 = vcmask 7168
        %768 = vst.msk [vmem:[%s432] sm:$0xff] %vm767, %v766
        %p769 = scmp.lt.s32.totalorder %s25, 1
        %s770 = scalar_select %p769, %s25, 1
        %s771 = smul.addr %s770, 8
        %s772 = scalar_lea.vmem %s11, %s771
        // Predicated region
        $region69: #{ratio_forward.1} parent=63 // pred_check
          %p773 = pneg %p289
        $region70: #{ratio_forward.1} parent=63 // pred_check_branch
          %775 = sbr.rel (%p773) target = $region72
        $region71: #{ratio_forward.1} parent=63 // pred_region
          _
        $region72: #{ratio_forward.1} parent=63 // pred_fallthru
          _
      $region64: #{ratio_forward.1} parent=5 // pred_fallthru
        _
      %p776 = scmp.le.s32.totalorder 2, %s20
      // Predicated region
      $region73: #{ratio_forward.1} parent=5 // pred_check
        %p777 = pneg %p776
      $region74: #{ratio_forward.1} parent=5 // pred_check_branch
        %779 = sbr.rel (%p777) target = $region76
      $region75: #{ratio_forward.1} parent=5 // pred_region
        %s780 = ssub.s32 %s20, 2
        // Predicated region
        $region77: #{ratio_forward.1} parent=75 // pred_check
          %p781 = pneg %p295
        $region78: #{ratio_forward.1} parent=75 // pred_check_branch
          %783 = sbr.rel (%p781) target = $region80
        $region79: #{ratio_forward.1} parent=75 // pred_region
          %p784 = scmp.lt.s32.totalorder %s26, 1
          %s785 = scalar_select %p784, %s26, 1
          %s786 = smul.addr %s785, 8
          %s787 = scalar_lea.vmem %s11, %s786
        $region80: #{ratio_forward.1} parent=75 // pred_fallthru
          _
      $region76: #{ratio_forward.1} parent=5 // pred_fallthru
        _
    $region6: #{ratio_forward.1} parent=1 // loop_footer
      %s24 = sadd.s32 1, %s20
    $region7: #{ratio_forward.1} parent=1 // loop_footer_branch
      %19 = sbr.rel target = $region3
    $region8: #{ratio_forward.1} parent=1 // loop_exit
      _
    %788 = vsyncpa [#allocation5], 1
    %s789 = scalar_lea.sflag [#allocation5], 1
    %790 = vsyncpa %s789, 1

</llo_original>
